<compile_context>
chip_gen: v6e
topology: v6e:2x2x1
jax: 0.10.0
libtpu: 0.0.40
codegen_flags: <defaults>
</compile_context>

<pallas_src>
import functools
import math

import jax
import jax.numpy as jnp
from jax.experimental import pallas as pl
from jax.experimental.pallas import tpu as pltpu


def _gcn_kernel(att_ref, xs_ref, w_ref, b_ref, o_ref, *, reorder):
    # att_ref: (row_tile, N)       row tile of the graph "attention" matrix
    # xs_ref:  (N, B*F_in)         batches stacked along the lane axis
    # w_ref:   (B*F_in, B*F_out)   block-diagonal weight  kron(I_B, W)
    # b_ref:   (1, B*F_out)        bias tiled per batch (f32)
    # o_ref:   (row_tile, B*F_out) lane-dense output slab
    att_t = att_ref[...]
    xs = xs_ref[...]
    w = w_ref[...]
    if reorder:
        # (att @ x) @ W : the N^2 term contracts over the narrower F_in width.
        ax = jnp.dot(att_t, xs, preferred_element_type=jnp.float32)
        y = jnp.dot(ax.astype(w.dtype), w, preferred_element_type=jnp.float32)
    else:
        # att @ (x @ W)
        xw = jnp.dot(xs, w, preferred_element_type=jnp.float32)
        y = jnp.dot(att_t, xw.astype(att_t.dtype), preferred_element_type=jnp.float32)
    o_ref[...] = (y + b_ref[...]).astype(o_ref.dtype)


def graph_convolution(x, weight, att, bias, *, compute_dtype=None):
    """x: (B, N, F_in), weight: (F_in, F_out), att: (N, N), bias: (F_out,)."""
    B, N, F_in = x.shape
    F_out = weight.shape[1]
    out_dtype = x.dtype

    # ---- layout plumbing (outside the kernel, pure reshapes/transposes) ----
    # Stack batches along the lane (last) axis: (B, N, F_in) -> (N, B*F_in).
    xs = jnp.transpose(x, (1, 0, 2)).reshape(N, B * F_in)
    # Block-diagonal weight: one 2-D matmul applies W per batch lane-block.
    # Extra flops/bytes scale with B only on the *small* matmul; fine for small B.
    w_bd = jnp.kron(jnp.eye(B, dtype=weight.dtype), weight)        # (B*F_in, B*F_out)
    bias_bd = jnp.tile(bias.astype(jnp.float32), B).reshape(1, B * F_out)

    att_in = att
    if compute_dtype is not None:            # e.g. jnp.bfloat16 on v6e/v7x
        xs = xs.astype(compute_dtype)
        w_bd = w_bd.astype(compute_dtype)
        att_in = att.astype(compute_dtype)

    # (att @ x) @ W is cheaper when F_in < F_out (associativity-equivalent).
    reorder = F_in < F_out

    # Row-tile att/output so v7x's two TensorCores each get a 'parallel' step.
    # Tile rows must be a multiple of 8 (sublane) or the full N.
    row_tile = N // 2 if (N % 16 == 0) else N
    n_row_tiles = N // row_tile

    inner = B * F_in if reorder else B * F_out
    cost = pl.CostEstimate(
        flops=2 * N * N * inner + 2 * N * (B * F_in) * (B * F_out),
        transcendentals=0,
        bytes_accessed=(xs.size * xs.dtype.itemsize
                        + w_bd.size * w_bd.dtype.itemsize
                        + att_in.size * att_in.dtype.itemsize
                        + bias_bd.size * bias_bd.dtype.itemsize
                        + N * B * F_out * out_dtype.itemsize),
    )

    out = pl.pallas_call(
        functools.partial(_gcn_kernel, reorder=reorder),
        out_shape=jax.ShapeDtypeStruct((N, B * F_out), out_dtype),
        grid_spec=pltpu.PrefetchScalarGridSpec(
            num_scalar_prefetch=0,
            grid=(n_row_tiles,),
            in_specs=[
                pl.BlockSpec((row_tile, N), lambda i: (i, 0)),           # att row tile
                pl.BlockSpec((N, B * F_in), lambda i: (0, 0)),           # xs (invariant)
                pl.BlockSpec((B * F_in, B * F_out), lambda i: (0, 0)),   # W_bd (invariant)
                pl.BlockSpec((1, B * F_out), lambda i: (0, 0)),          # bias (invariant)
            ],
            out_specs=pl.BlockSpec((row_tile, B * F_out), lambda i: (i, 0)),
        ),
        compiler_params=pltpu.CompilerParams(
            dimension_semantics=("parallel",),
            # NOTE: for production-scale N, add a second ('arbitrary', last)
            # grid axis over att columns / xs rows and raise vmem_limit_bytes
            # (mandatory on v7x 64 MiB VMEM, advisable on v5e's 16 MiB scoped
            # default) instead of loading full (row_tile, N) att rows.
        ),
        cost_estimate=cost,
    )(att_in, xs, w_bd, bias_bd)

    # (N, B*F_out) -> (B, N, F_out)
    return jnp.transpose(out.reshape(N, B, F_out), (1, 0, 2))


def init_params(key, in_features, out_features, node_n):
    """Deterministic init matching PyTorch reset_parameters (uniform(-stdv, stdv))."""
    stdv = 1.0 / math.sqrt(out_features)
    kw, ka, kb = jax.random.split(key, 3)
    weight = jax.random.uniform(kw, (in_features, out_features), jnp.float32, -stdv, stdv)
    att = jax.random.uniform(ka, (node_n, node_n), jnp.float32, -stdv, stdv)
    bias = jax.random.uniform(kb, (out_features,), jnp.float32, -stdv, stdv)
    return weight, att, bias


if __name__ == "__main__":
    key = jax.random.PRNGKey(0)
    k_x, k_p = jax.random.split(key)

    B, node_n, in_features, out_features = 2, 48, 16, 32
    x = jax.random.normal(k_x, (B, node_n, in_features), jnp.float32)
    weight, att, bias = init_params(k_p, in_features, out_features, node_n)

    out = graph_convolution(x, weight, att, bias)
    out = jax.block_until_ready(out)

    # Reference check (pure JAX).  The kernel computes (att @ x) @ W when
    # F_in < F_out; associativity-equivalent, so only rounding-level deltas.
    ref = jnp.matmul(att, jnp.matmul(x, weight)) + bias
    assert out.shape == (B, node_n, out_features)
    assert jnp.allclose(out, ref, atol=1e-4, rtol=1e-4)

    print("KERNEL_OK")
</pallas_src>

<mosaic_0001>
module attributes {stable_mosaic.version = 11 : i64} {
  func.func @_gcn_kernel(%arg0: i32, %arg1: memref<24x48xf32, #tpu.memory_space<vmem>>, %arg2: memref<48x32xf32, #tpu.memory_space<vmem>>, %arg3: memref<32x64xf32, #tpu.memory_space<vmem>>, %arg4: memref<1x64xf32, #tpu.memory_space<vmem>>, %arg5: memref<24x64xf32, #tpu.memory_space<vmem>>) attributes {dimension_semantics = [#tpu.dimension_semantics<parallel>], iteration_bounds = array<i64: 2>, scalar_prefetch = 0 : i64, scratch_operands = 0 : i64, tpu.core_type = #tpu.core_type<tc>, window_params = [{transform_indices = @transform_0, window_bounds = array<i64: 24, 48>}, {pipeline_mode = #tpu.pipeline_mode<synchronous>, transform_indices = @transform_1, window_bounds = array<i64: 48, 32>}, {pipeline_mode = #tpu.pipeline_mode<synchronous>, transform_indices = @transform_2, window_bounds = array<i64: 32, 64>}, {pipeline_mode = #tpu.pipeline_mode<synchronous>, transform_indices = @transform_3, window_bounds = array<i64: 1, 64>}, {transform_indices = @transform_4, window_bounds = array<i64: 24, 64>}]} {
    %c0 = arith.constant 0 : index
    %c0_0 = arith.constant 0 : index
    %0 = vector.load %arg1[%c0, %c0_0] : memref<24x48xf32, #tpu.memory_space<vmem>>, vector<24x48xf32>
    %c0_1 = arith.constant 0 : index
    %c0_2 = arith.constant 0 : index
    %1 = vector.load %arg2[%c0_1, %c0_2] : memref<48x32xf32, #tpu.memory_space<vmem>>, vector<48x32xf32>
    %c0_3 = arith.constant 0 : index
    %c0_4 = arith.constant 0 : index
    %2 = vector.load %arg3[%c0_3, %c0_4] : memref<32x64xf32, #tpu.memory_space<vmem>>, vector<32x64xf32>
    %cst = arith.constant dense<0.000000e+00> : vector<24x32xf32>
    %3 = tpu.matmul %0, %1, %cst {dimension_numbers = #tpu.dot_dimension_numbers<[1], [0], [0], [1], [0, 0, 1, 1], [], []>} : vector<24x48xf32>, vector<48x32xf32>, vector<24x32xf32> -> vector<24x32xf32>
    %cst_5 = arith.constant dense<0.000000e+00> : vector<24x64xf32>
    %4 = tpu.matmul %3, %2, %cst_5 {dimension_numbers = #tpu.dot_dimension_numbers<[1], [0], [0], [1], [0, 0, 1, 1], [], []>} : vector<24x32xf32>, vector<32x64xf32>, vector<24x64xf32> -> vector<24x64xf32>
    %c0_6 = arith.constant 0 : index
    %c0_7 = arith.constant 0 : index
    %5 = vector.load %arg4[%c0_6, %c0_7] : memref<1x64xf32, #tpu.memory_space<vmem>>, vector<1x64xf32>
    %6 = vector.broadcast %5 : vector<1x64xf32> to vector<24x64xf32>
    %7 = arith.addf %4, %6 : vector<24x64xf32>
    %c0_8 = arith.constant 0 : index
    %c0_9 = arith.constant 0 : index
    %8 = vector.load %arg5[%c0_8, %c0_9] : memref<24x64xf32, #tpu.memory_space<vmem>>, vector<24x64xf32>
    tpu.vector_store %arg5[%c0_8, %c0_9], %7 {strides = array<i32>} : memref<24x64xf32, #tpu.memory_space<vmem>>, vector<24x64xf32>,
    return
  }
  func.func @transform_0(%arg0: i32) -> (i32, i32) {
    %c0_i32 = arith.constant 0 : i32
    %c0_i32_0 = arith.constant 0 : i32
    return %arg0, %c0_i32 : i32, i32
  }
  func.func @transform_1(%arg0: i32) -> (i32, i32) {
    %c0_i32 = arith.constant 0 : i32
    %c0_i32_0 = arith.constant 0 : i32
    %c0_i32_1 = arith.constant 0 : i32
    return %c0_i32, %c0_i32_0 : i32, i32
  }
  func.func @transform_2(%arg0: i32) -> (i32, i32) {
    %c0_i32 = arith.constant 0 : i32
    %c0_i32_0 = arith.constant 0 : i32
    %c0_i32_1 = arith.constant 0 : i32
    return %c0_i32, %c0_i32_0 : i32, i32
  }
  func.func @transform_3(%arg0: i32) -> (i32, i32) {
    %c0_i32 = arith.constant 0 : i32
    %c0_i32_0 = arith.constant 0 : i32
    %c0_i32_1 = arith.constant 0 : i32
    return %c0_i32, %c0_i32_0 : i32, i32
  }
  func.func @transform_4(%arg0: i32) -> (i32, i32) {
    %c0_i32 = arith.constant 0 : i32
    %c0_i32_0 = arith.constant 0 : i32
    return %arg0, %c0_i32 : i32, i32
  }
}

</mosaic_0001>

<llo_original>
// kernel: tpu_custom_call.1
$region0: #{tpu_custom_call.1}
  #allocation0 [shape = 'u32[]', space=smem, size = 0x4, offset = 0x4, fixed_abs, tag = 'smem constant byte address 0x4 - core index']
  #allocation1 [shape = 'u32[144,128]{1,0:T(1,128)}', space=vmem, size = 0x12000, scoped, tag = 'internal scratch']
  %s0 = inlined_call_operand.vmem [shape: f32[48,48], index: 0, kind: input, shape index: {}]
  %s1 = inlined_call_operand.vmem [shape: f32[48,32], index: 1, kind: input, shape index: {}]
  %s2 = inlined_call_operand.vmem [shape: f32[32,64], index: 2, kind: input, shape index: {}]
  %s3 = inlined_call_operand.vmem [shape: f32[1,64], index: 3, kind: input, shape index: {}]
  %s4 = inlined_call_operand.hbm [shape: f32[48,64], index: 4, kind: output, shape index: {}]
  %s5 = sld [smem:[#allocation0]]
  $region49: #{tpu_custom_call.1} parent=0
    _
  %s7 = ssub.s32 1, %s5
  %s8 = scalar_select 0, %s7, %s5
  $region1: #{tpu_custom_call.1} parent=0
    #allocation2 [shape = 'u8[24576]{0}', space=vmem, size = 0x6000, scoped, tag = 'output window, operand 0']
    #allocation3 [shape = 's32[2]{0}', space=sflag, size = 0x8, scoped, tag = 'scoped memory for tpu_custom_call.1']
    %9 = vsyncpa [#allocation3], 0
    %s10 = scalar_lea.sflag [#allocation3], 1
    %11 = vsyncpa %s10, 0
    loop: start=0, step=1, limit=4
    $region2: #{tpu_custom_call.1} parent=1 // loop_pre_header
      _
    $region3: #{tpu_custom_call.1} parent=1 // loop_header
      %s13 = sphi 0, %s17
      %p14 = scmp.ge.s32.totalorder %s13, 4
      %s23 = sphi 0, %s25
      %s26 = sphi 0, %s23
      %s27 = sphi 0, %s26
      %s43 = sphi 0, %s27
      %s47 = sphi 0, %s47
      %s49 = sphi 0, %s47
      %s50 = sphi 0, %s49
      %s64 = sphi 0, %s50
      %s68 = sphi 0, %s68
      %s70 = sphi 0, %s68
      %s71 = sphi 0, %s70
      %s85 = sphi 0, %s71
      %s89 = sphi 0, %s89
      %s91 = sphi 0, %s89
      %s92 = sphi 0, %s91
      %s106 = sphi 0, %s92
      %s112 = sphi 0, %s114
      %s115 = sphi 0, %s112
      %s116 = sphi 0, %s115
      %s132 = sphi 0, %s116
    $region4: #{tpu_custom_call.1} parent=1 // loop_header_branch
      %16 = sbr.rel (%p14) target = $region8
    $region5: #{tpu_custom_call.1} parent=1 // loop_body
      %s18 = ssub.s32 %s13, 1
      %s19 = ssub.s32 %s13, 2
      %s20 = sadd.s32 %s13, 1
      %s21 = ssub.s32 %s13, %s20
      %p22 = scmp.eq.s32.totalorder %s21, 0
      %s24 = sadd.s32 %s23, 1
      %s25 = scalar_select %p22, %s23, %s24
      %p28 = pneg %p22
      %p29 = scmp.eq.s32.totalorder %s13, 1
      %p30 = por %p28, %p29
      %p31 = scmp.ne.s32.totalorder %s23, %s26
      %p32 = scmp.eq.s32.totalorder %s13, 0
      %p33 = por %p31, %p32
      %p34 = scmp.ne.s32.totalorder %s23, %s26
      %p35 = scmp.eq.s32.totalorder %s18, 1
      %p36 = por %p34, %p35
      %p37 = scmp.ne.s32.totalorder %s26, %s27
      %p38 = scmp.eq.s32.totalorder %s18, 0
      %p39 = por %p37, %p38
      %p40 = scmp.ne.s32.totalorder %s26, %s27
      %p41 = scmp.eq.s32.totalorder %s19, 1
      %p42 = por %p40, %p41
      %p44 = scmp.ne.s32.totalorder %s27, %s43
      %p45 = scmp.eq.s32.totalorder %s19, 0
      %p46 = por %p44, %p45
      %s48 = sadd.s32 %s47, 1
      %p51 = scmp.eq.s32.totalorder %s13, 1
      %p52 = scmp.ne.s32.totalorder %s47, %s49
      %p53 = scmp.eq.s32.totalorder %s13, 0
      %p54 = por %p52, %p53
      %p55 = scmp.ne.s32.totalorder %s47, %s49
      %p56 = scmp.eq.s32.totalorder %s18, 1
      %p57 = por %p55, %p56
      %p58 = scmp.ne.s32.totalorder %s49, %s50
      %p59 = scmp.eq.s32.totalorder %s18, 0
      %p60 = por %p58, %p59
      %p61 = scmp.ne.s32.totalorder %s49, %s50
      %p62 = scmp.eq.s32.totalorder %s19, 1
      %p63 = por %p61, %p62
      %p65 = scmp.ne.s32.totalorder %s50, %s64
      %p66 = scmp.eq.s32.totalorder %s19, 0
      %p67 = por %p65, %p66
      %s69 = sadd.s32 %s68, 1
      %p72 = scmp.eq.s32.totalorder %s13, 1
      %p73 = scmp.ne.s32.totalorder %s68, %s70
      %p74 = scmp.eq.s32.totalorder %s13, 0
      %p75 = por %p73, %p74
      %p76 = scmp.ne.s32.totalorder %s68, %s70
      %p77 = scmp.eq.s32.totalorder %s18, 1
      %p78 = por %p76, %p77
      %p79 = scmp.ne.s32.totalorder %s70, %s71
      %p80 = scmp.eq.s32.totalorder %s18, 0
      %p81 = por %p79, %p80
      %p82 = scmp.ne.s32.totalorder %s70, %s71
      %p83 = scmp.eq.s32.totalorder %s19, 1
      %p84 = por %p82, %p83
      %p86 = scmp.ne.s32.totalorder %s71, %s85
      %p87 = scmp.eq.s32.totalorder %s19, 0
      %p88 = por %p86, %p87
      %s90 = sadd.s32 %s89, 1
      %p93 = scmp.eq.s32.totalorder %s13, 1
      %p94 = scmp.ne.s32.totalorder %s89, %s91
      %p95 = scmp.eq.s32.totalorder %s13, 0
      %p96 = por %p94, %p95
      %p97 = scmp.ne.s32.totalorder %s89, %s91
      %p98 = scmp.eq.s32.totalorder %s18, 1
      %p99 = por %p97, %p98
      %p100 = scmp.ne.s32.totalorder %s91, %s92
      %p101 = scmp.eq.s32.totalorder %s18, 0
      %p102 = por %p100, %p101
      %p103 = scmp.ne.s32.totalorder %s91, %s92
      %p104 = scmp.eq.s32.totalorder %s19, 1
      %p105 = por %p103, %p104
      %p107 = scmp.ne.s32.totalorder %s92, %s106
      %p108 = scmp.eq.s32.totalorder %s19, 0
      %p109 = por %p107, %p108
      %s110 = ssub.s32 %s13, %s20
      %p111 = scmp.eq.s32.totalorder %s110, 0
      %s113 = sadd.s32 %s112, 1
      %s114 = scalar_select %p111, %s112, %s113
      %p117 = pneg %p111
      %p118 = scmp.eq.s32.totalorder %s13, 1
      %p119 = por %p117, %p118
      %p120 = scmp.ne.s32.totalorder %s112, %s115
      %p121 = scmp.eq.s32.totalorder %s13, 0
      %p122 = por %p120, %p121
      %p123 = scmp.ne.s32.totalorder %s112, %s115
      %p124 = scmp.eq.s32.totalorder %s18, 1
      %p125 = por %p123, %p124
      %p126 = scmp.ne.s32.totalorder %s115, %s116
      %p127 = scmp.eq.s32.totalorder %s18, 0
      %p128 = por %p126, %p127
      %p129 = scmp.ne.s32.totalorder %s115, %s116
      %p130 = scmp.eq.s32.totalorder %s19, 1
      %p131 = por %p129, %p130
      %p133 = scmp.ne.s32.totalorder %s116, %s132
      %p134 = scmp.eq.s32.totalorder %s19, 0
      %p135 = por %p133, %p134
      %p136 = scmp.le.s32.totalorder 1, %s13
      %p137 = scmp.lt.s32.totalorder %s13, 3
      %p138 = pnand %p136, %p137
      %p139 = pneg %p138
      // Predicated region
      $region9: #{tpu_custom_call.1} parent=5 // pred_check
        _
      $region10: #{tpu_custom_call.1} parent=5 // pred_check_branch
        %141 = sbr.rel (%p138) target = $region12
      $region11: #{tpu_custom_call.1} parent=5 // pred_region
        %s142 = ssub.s32 %s13, 1
        // Predicated region
        $region13: #{tpu_custom_call.1} parent=11 // pred_check
          %p143 = pneg %p60
        $region14: #{tpu_custom_call.1} parent=11 // pred_check_branch
          %145 = sbr.rel (%p143) target = $region16
        $region15: #{tpu_custom_call.1} parent=11 // pred_region
          _
        $region16: #{tpu_custom_call.1} parent=11 // pred_fallthru
          _
        // Predicated region
        $region17: #{tpu_custom_call.1} parent=11 // pred_check
          %p146 = pneg %p81
        $region18: #{tpu_custom_call.1} parent=11 // pred_check_branch
          %148 = sbr.rel (%p146) target = $region20
        $region19: #{tpu_custom_call.1} parent=11 // pred_region
          _
        $region20: #{tpu_custom_call.1} parent=11 // pred_fallthru
          _
        // Predicated region
        $region21: #{tpu_custom_call.1} parent=11 // pred_check
          %p149 = pneg %p102
        $region22: #{tpu_custom_call.1} parent=11 // pred_check_branch
          %151 = sbr.rel (%p149) target = $region24
        $region23: #{tpu_custom_call.1} parent=11 // pred_region
          _
        $region24: #{tpu_custom_call.1} parent=11 // pred_fallthru
          _
      $region12: #{tpu_custom_call.1} parent=5 // pred_fallthru
        _
      %p152 = scmp.lt.s32.totalorder %s13, 2
      // Predicated region
      $region25: #{tpu_custom_call.1} parent=5 // pred_check
        %p153 = pneg %p152
      $region26: #{tpu_custom_call.1} parent=5 // pred_check_branch
        %155 = sbr.rel (%p153) target = $region28
      $region27: #{tpu_custom_call.1} parent=5 // pred_region
        // Predicated region
        $region29: #{tpu_custom_call.1} parent=27 // pred_check
          %p156 = pneg %p33
        $region30: #{tpu_custom_call.1} parent=27 // pred_check_branch
          %158 = sbr.rel (%p156) target = $region32
        $region31: #{tpu_custom_call.1} parent=27 // pred_region
          %s159 = smul.u32 3, %s13
          %p160 = scmp.lt.s32.totalorder %s159, 5
          %s161 = scalar_select %p160, %s159, 5
          %s162 = smul.addr %s161, 8
          %s163 = scalar_lea.vmem %s0, %s162
          %s164 = smul.u32 3, %s13
        $region32: #{tpu_custom_call.1} parent=27 // pred_fallthru
          _
      $region28: #{tpu_custom_call.1} parent=5 // pred_fallthru
        _
      %p165 = scmp.le.s32.totalorder 1, %s13
      %p166 = scmp.lt.s32.totalorder %s13, 3
      %p167 = pnand %p165, %p166
      %p168 = pneg %p167
      // Predicated region
      $region33: #{tpu_custom_call.1} parent=5 // pred_check
        _
      $region34: #{tpu_custom_call.1} parent=5 // pred_check_branch
        %170 = sbr.rel (%p167) target = $region36
      $region35: #{tpu_custom_call.1} parent=5 // pred_region
        %s171 = ssub.s32 %s13, 1
        %s172 = smul.u32 3, %s18
        %p173 = scmp.lt.s32.totalorder %s172, 5
        %s174 = scalar_select %p173, %s172, 5
        %s175 = smul.addr %s174, 8
        %s176 = scalar_lea.vmem %s0, %s175
        %p177 = pneg %p39
        %p178 = pneg %p36
        %p179 = pneg %p60
        %p180 = pneg %p57
        %p181 = pneg %p81
        %p182 = pneg %p78
        %p183 = pneg %p102
        %p184 = pneg %p99
        %p185 = pneg %p128
        %p186 = pneg %p125
        %s187 = sand.u32 %s115, 1
        %s188 = scalar_lea.sflag [#allocation3], %s187
        %s189 = sand.u32 %s115, 1
        %s190 = smul.addr %s189, 24
        %s191 = scalar_lea.vmem [#allocation2], %s190
        %s192 = smul.u32 3, %s18
        %p193 = scmp.lt.s32.totalorder %s192, 5
        %s194 = scalar_select %p193, %s192, 5
        %s195 = smul.addr %s194, 8
        %s196 = scalar_lea.vmem %s0, %s195
        %s197 = smul.u32 3, %s18
        %s198 = smul.u32 3, %s18
        %v199 = vld [vmem:[%s196] sm:$0xff]
        %v200 = vld [vmem:[%s196 + $0x8] sm:$0xff]
        %v201 = vld [vmem:[%s196 + $0x10] sm:$0xff]
        %v202 = vld [vmem:[%s1] sm:$0xff]
        %v203 = vld [vmem:[%s1 + $0x8] sm:$0xff]
        %v204 = vld [vmem:[%s1 + $0x10] sm:$0xff]
        %v205 = vld [vmem:[%s1 + $0x18] sm:$0xff]
        %v206 = vld [vmem:[%s1 + $0x20] sm:$0xff]
        %v207 = vld [vmem:[%s1 + $0x28] sm:$0xff]
        %v208 = vld [vmem:[%s2] sm:$0xff]
        %v209 = vld [vmem:[%s2 + $0x8] sm:$0xff]
        %v210 = vld [vmem:[%s2 + $0x10] sm:$0xff]
        %v211 = vld [vmem:[%s2 + $0x18] sm:$0xff]
        %vm212 = vcmask 392192
        %v214 = vsel %vm212, %v199, 0
        %v217 = vsel %vm212, %v200, 0
        %v220 = vsel %vm212, %v201, 0
        %222 = vmatprep.subr.mxu0 0.0
        %223 = vmatpush1.msra.mxu0 0.0
        %224 = vmatprep.subr.mxu0 0.0
        %225 = vmatpush1.msra.mxu0 0.0
        %226 = vmatprep.subr.mxu0 0.0
        %227 = vmatpush1.msra.mxu0 0.0
        %228 = vmatprep.subr.mxu0 0.0
        %229 = vmatpush1.msra.mxu0 0.0
        %230 = vmatprep.subr.mxu0 0.0
        %231 = vmatpush1.msra.mxu0 0.0
        %232 = vmatprep.subr.mxu0 0.0
        %233 = vmatpush1.msra.mxu0 0.0
        %234 = vmatprep.subr.mxu0 0.0
        %235 = vmatpush1.msra.mxu0 0.0
        %236 = vmatprep.subr.mxu0 0.0
        %237 = vmatpush1.msra.mxu0 0.0
        %238 = vmatprep.subr.mxu0 0.0
        %239 = vmatpush1.msra.mxu0 0.0
        %240 = vmatprep.subr.mxu0 0.0
        %241 = vmatpush1.msra.mxu0 0.0
        %242 = vmatprep.subr.mxu0 0.0
        %243 = vmatpush1.msra.mxu0 %v207
        %244 = vmatprep.subr.mxu0 0.0
        %245 = vmatpush1.msra.mxu0 %v206
        %246 = vmatprep.subr.mxu0 0.0
        %247 = vmatpush1.msra.mxu0 %v205
        %248 = vmatprep.subr.mxu0 0.0
        %249 = vmatpush1.msra.mxu0 %v204
        %250 = vmatprep.subr.mxu0 0.0
        %251 = vmatpush1.msra.mxu0 %v203
        %252 = vmatprep.subr.mxu0 0.0
        %253 = vmatpush1.msra.mxu0 %v202
        %254 = vmatprep.subr.mxu0 0.0
        %255 = vmatpush2.msra.mxu0 0.0
        %256 = vmatprep.subr.mxu0 0.0
        %257 = vmatpush2.msra.mxu0 0.0
        %258 = vmatprep.subr.mxu0 0.0
        %259 = vmatpush2.msra.mxu0 0.0
        %260 = vmatprep.subr.mxu0 0.0
        %261 = vmatpush2.msra.mxu0 0.0
        %262 = vmatprep.subr.mxu0 0.0
        %263 = vmatpush2.msra.mxu0 0.0
        %264 = vmatprep.subr.mxu0 0.0
        %265 = vmatpush2.msra.mxu0 0.0
        %266 = vmatprep.subr.mxu0 0.0
        %267 = vmatpush2.msra.mxu0 0.0
        %268 = vmatprep.subr.mxu0 0.0
        %269 = vmatpush2.msra.mxu0 0.0
        %270 = vmatprep.subr.mxu0 0.0
        %271 = vmatpush2.msra.mxu0 0.0
        %272 = vmatprep.subr.mxu0 0.0
        %273 = vmatpush2.msra.mxu0 0.0
        %274 = vmatprep.subr.mxu0 0.0
        %275 = vmatpush2.msra.mxu0 0.0
        %276 = vmatprep.subr.mxu0 0.0
        %277 = vmatpush2.msra.mxu0 0.0
        %278 = vmatprep.subr.mxu0 0.0
        %279 = vmatpush2.msra.mxu0 0.0
        %280 = vmatprep.subr.mxu0 0.0
        %281 = vmatpush2.msra.mxu0 0.0
        %282 = vmatprep.subr.mxu0 0.0
        %283 = vmatpush2.msra.mxu0 0.0
        %284 = vmatprep.subr.mxu0 0.0
        %285 = vmatpush2.msra.mxu0 0.0
        %286 = vmatprep.mubr.f32.mxu0 0.0
        %287 = vmatmul.mubr.f32.gmra.mxu0 %v214
        %v288 = vpop.f32.mrf.mxu0
        %v289 = vadd.f32 0.0, %v288
        %v290 = vpop.f32.mrf.mxu0
        %291 = vmatprep.mubr.f32.mxu0 0.0
        %292 = vmatmul.mubr.f32.gmra.mxu0 %v217
        %v293 = vpop.f32.mrf.mxu0
        %v294 = vadd.f32 0.0, %v293
        %v295 = vpop.f32.mrf.mxu0
        %296 = vmatprep.mubr.f32.mxu0 0.0
        %297 = vmatmul.mubr.f32.gmra.mxu0 %v220
        %v298 = vpop.f32.mrf.mxu0
        %v299 = vadd.f32 0.0, %v298
        %v300 = vpop.f32.mrf.mxu0
        %301 = vdwg.mxu0
        %v302 = vld [vmem:[%s3] sm:$0x1]
        %v304 = vlaneseq
        %v305 = vshrl.u32 %v304, 7
        %v306 = vsub.s32 0, %v305
        %v307 = vrot.slane %v302, %v306
        %vm309 = vcmask 261120
        %v311 = vsel %vm309, %v289, 0
        %v314 = vsel %vm309, %v294, 0
        %v317 = vsel %vm309, %v299, 0
        %319 = vmatprep.subr.mxu0 0.0
        %320 = vmatpush1.msra.mxu0 0.0
        %321 = vmatprep.subr.mxu0 0.0
        %322 = vmatpush1.msra.mxu0 0.0
        %323 = vmatprep.subr.mxu0 0.0
        %324 = vmatpush1.msra.mxu0 0.0
        %325 = vmatprep.subr.mxu0 0.0
        %326 = vmatpush1.msra.mxu0 0.0
        %327 = vmatprep.subr.mxu0 0.0
        %328 = vmatpush1.msra.mxu0 0.0
        %329 = vmatprep.subr.mxu0 0.0
        %330 = vmatpush1.msra.mxu0 0.0
        %331 = vmatprep.subr.mxu0 0.0
        %332 = vmatpush1.msra.mxu0 0.0
        %333 = vmatprep.subr.mxu0 0.0
        %334 = vmatpush1.msra.mxu0 0.0
        %335 = vmatprep.subr.mxu0 0.0
        %336 = vmatpush1.msra.mxu0 0.0
        %337 = vmatprep.subr.mxu0 0.0
        %338 = vmatpush1.msra.mxu0 0.0
        %339 = vmatprep.subr.mxu0 0.0
        %340 = vmatpush1.msra.mxu0 0.0
        %341 = vmatprep.subr.mxu0 0.0
        %342 = vmatpush1.msra.mxu0 0.0
        %343 = vmatprep.subr.mxu0 0.0
        %344 = vmatpush1.msra.mxu0 %v211
        %345 = vmatprep.subr.mxu0 0.0
        %346 = vmatpush1.msra.mxu0 %v210
        %347 = vmatprep.subr.mxu0 0.0
        %348 = vmatpush1.msra.mxu0 %v209
        %349 = vmatprep.subr.mxu0 0.0
        %350 = vmatpush1.msra.mxu0 %v208
        %351 = vmatprep.subr.mxu0 0.0
        %352 = vmatpush2.msra.mxu0 0.0
        %353 = vmatprep.subr.mxu0 0.0
        %354 = vmatpush2.msra.mxu0 0.0
        %355 = vmatprep.subr.mxu0 0.0
        %356 = vmatpush2.msra.mxu0 0.0
        %357 = vmatprep.subr.mxu0 0.0
        %358 = vmatpush2.msra.mxu0 0.0
        %359 = vmatprep.subr.mxu0 0.0
        %360 = vmatpush2.msra.mxu0 0.0
        %361 = vmatprep.subr.mxu0 0.0
        %362 = vmatpush2.msra.mxu0 0.0
        %363 = vmatprep.subr.mxu0 0.0
        %364 = vmatpush2.msra.mxu0 0.0
        %365 = vmatprep.subr.mxu0 0.0
        %366 = vmatpush2.msra.mxu0 0.0
        %367 = vmatprep.subr.mxu0 0.0
        %368 = vmatpush2.msra.mxu0 0.0
        %369 = vmatprep.subr.mxu0 0.0
        %370 = vmatpush2.msra.mxu0 0.0
        %371 = vmatprep.subr.mxu0 0.0
        %372 = vmatpush2.msra.mxu0 0.0
        %373 = vmatprep.subr.mxu0 0.0
        %374 = vmatpush2.msra.mxu0 0.0
        %375 = vmatprep.subr.mxu0 0.0
        %376 = vmatpush2.msra.mxu0 0.0
        %377 = vmatprep.subr.mxu0 0.0
        %378 = vmatpush2.msra.mxu0 0.0
        %379 = vmatprep.subr.mxu0 0.0
        %380 = vmatpush2.msra.mxu0 0.0
        %381 = vmatprep.subr.mxu0 0.0
        %382 = vmatpush2.msra.mxu0 0.0
        %383 = vmatprep.mubr.f32.mxu0 0.0
        %384 = vmatmul.mubr.f32.gmra.mxu0 %v311
        %v385 = vpop.f32.mrf.mxu0
        %v386 = vadd.f32 %v307, %v385
        %v387 = vpop.f32.mrf.mxu0
        %388 = vmatprep.mubr.f32.mxu0 0.0
        %389 = vmatmul.mubr.f32.gmra.mxu0 %v314
        %v390 = vpop.f32.mrf.mxu0
        %v391 = vadd.f32 %v307, %v390
        %v392 = vpop.f32.mrf.mxu0
        %393 = vmatprep.mubr.f32.mxu0 0.0
        %394 = vmatmul.mubr.f32.gmra.mxu0 %v317
        %v395 = vpop.f32.mrf.mxu0
        %v396 = vadd.f32 %v307, %v395
        %v397 = vpop.f32.mrf.mxu0
        %398 = vdwg.mxu0
        %vm399 = vcmask 523264
        %400 = vst.msk [vmem:[%s191] sm:$0xff] %vm399, %v386
        %401 = vst.msk [vmem:[%s191 + $0x8] sm:$0xff] %vm399, %v391
        %402 = vst.msk [vmem:[%s191 + $0x10] sm:$0xff] %vm399, %v396
        %s403 = sand.u32 %s115, 1
        %s404 = scalar_lea.sflag [#allocation3], %s403
        %s405 = sand.u32 %s115, 1
        %s406 = smul.addr %s405, 24
        %s407 = scalar_lea.vmem [#allocation2], %s406
        // Predicated region
        $region37: #{tpu_custom_call.1} parent=35 // pred_check
          %p408 = pneg %p125
        $region38: #{tpu_custom_call.1} parent=35 // pred_check_branch
          %410 = sbr.rel (%p408) target = $region40
        $region39: #{tpu_custom_call.1} parent=35 // pred_region
          %s411 = smul.u32 3, %s18
          %s413 = ssub.s32 384, 384
          %414 = vsyncadd %s404, %s413
          %s415 = smul.addr %s411, 128
          %s416 = scalar_lea.hbm %s4, %s415
          %s417 = sshll.u32 %s407, 4
          %s418 = int_to_ptr.vmem [resolvable:$true] %s417
          %423 = dma.vmem_to_hbm [thread:$0]  %s418, 384, %s416, %s404, 128, 128, 8
        $region40: #{tpu_custom_call.1} parent=35 // pred_fallthru
          _
      $region36: #{tpu_custom_call.1} parent=5 // pred_fallthru
        _
      %p424 = scmp.le.s32.totalorder 2, %s13
      // Predicated region
      $region41: #{tpu_custom_call.1} parent=5 // pred_check
        %p425 = pneg %p424
      $region42: #{tpu_custom_call.1} parent=5 // pred_check_branch
        %427 = sbr.rel (%p425) target = $region44
      $region43: #{tpu_custom_call.1} parent=5 // pred_region
        %s428 = ssub.s32 %s13, 2
        // Predicated region
        $region45: #{tpu_custom_call.1} parent=43 // pred_check
          %p429 = pneg %p131
        $region46: #{tpu_custom_call.1} parent=43 // pred_check_branch
          %431 = sbr.rel (%p429) target = $region48
        $region47: #{tpu_custom_call.1} parent=43 // pred_region
          %s432 = sand.u32 %s116, 1
          %s433 = scalar_lea.sflag [#allocation3], %s432
          %s434 = sand.u32 %s116, 1
          %s435 = smul.addr %s434, 24
          %s436 = scalar_lea.vmem [#allocation2], %s435
          %437 = dma.done %s433, 384
        $region48: #{tpu_custom_call.1} parent=43 // pred_fallthru
          _
      $region44: #{tpu_custom_call.1} parent=5 // pred_fallthru
        _
    $region6: #{tpu_custom_call.1} parent=1 // loop_footer
      %s17 = sadd.s32 1, %s13
    $region7: #{tpu_custom_call.1} parent=1 // loop_footer_branch
      %12 = sbr.rel target = $region3
    $region8: #{tpu_custom_call.1} parent=1 // loop_exit
      _
    %438 = vsyncpa [#allocation3], 1
    %s439 = scalar_lea.sflag [#allocation3], 1
    %440 = vsyncpa %s439, 1

</llo_original>
